<compile_context>
chip_gen: v5e
topology: v5e:2x2
jax: 0.10.0
libtpu: 0.0.40
codegen_flags: <defaults>
</compile_context>

<pallas_src>
import jax
import jax.numpy as jnp
from jax.experimental import pallas as pl
from jax.experimental.pallas import tpu as pltpu

IN_FEATURES = 768
OUT_FEATURES = 128


def _mlp_audio_kernel(x_ref, w_ref, b_ref, o_ref):
    # x_ref: (TM, 768) bf16, w_ref: (768, 128) bf16, b_ref: (1, 128) f32,
    # o_ref: (TM, 128) f32
    y = jnp.dot(x_ref[...], w_ref[...], preferred_element_type=jnp.float32)
    y = y + b_ref[...]            # broadcast (1, 128) over rows
    y = jnp.maximum(y, 0.0)       # ReLU
    # TODO(synk): torch.nn.Dropout(0.1) is identity in eval mode; training-mode
    #             stochastic masking (pltpu.prng_*) is not implemented here.
    o_ref[...] = y.astype(o_ref.dtype)


def _round_up(x, m):
    return ((x + m - 1) // m) * m


def _candidate_semantics():
    """Preferred dimension_semantics first, with a safe fallback."""
    cands = []
    core_parallel = getattr(pltpu, "CORE_PARALLEL", None)
    if core_parallel is not None:
        cands.append((core_parallel,))   # splits batch axis across v7x's 2 TCs
    cands.append(("parallel",))          # no-op-ish but always accepted
    return cands


def _invoke(x, w, b2d, *, tile_m, grid, batch, cost, dim_sem):
    return pl.pallas_call(
        _mlp_audio_kernel,
        out_shape=jax.ShapeDtypeStruct((batch, OUT_FEATURES), jnp.float32),
        grid=grid,
        in_specs=[
            # Streamed activation tiles: double-buffered across the grid.
            pl.BlockSpec((tile_m, IN_FEATURES), lambda i: (i, 0)),
            # Weight / bias: same block every step -> resident, DMA'd once.
            pl.BlockSpec((IN_FEATURES, OUT_FEATURES), lambda i: (0, 0)),
            pl.BlockSpec((1, OUT_FEATURES), lambda i: (0, 0)),
        ],
        out_specs=pl.BlockSpec((tile_m, OUT_FEATURES), lambda i: (i, 0)),
        compiler_params=pltpu.CompilerParams(
            dimension_semantics=dim_sem,
            vmem_limit_bytes=32 * 1024 * 1024,
        ),
        cost_estimate=cost,
    )(x, w, b2d)


def mlp_audio(raw_audio_emo, w, b, *, tm=2048, compute_dtype=jnp.bfloat16):
    """raw_audio_emo: (B, 768), w: (768, 128), b: (128,) -> (B, 1, 128) f32."""
    batch = raw_audio_emo.shape[0]

    tm = max(8, _round_up(int(tm), 8))
    if batch <= tm:
        tile_m = batch            # single block == full dim (always legal), grid of 1
    else:
        tile_m = tm               # multiple of 8; ragged last block masked by Pallas
    grid = (pl.cdiv(batch, tile_m),)

    # bf16 activation / weight stream; f32 accumulate + bias + output.
    x = raw_audio_emo.astype(compute_dtype)
    wk = w.astype(compute_dtype)
    b2d = b.reshape(1, OUT_FEATURES).astype(jnp.float32)

    cost = pl.CostEstimate(
        flops=2 * batch * IN_FEATURES * OUT_FEATURES,
        transcendentals=0,
        bytes_accessed=(x.size * x.dtype.itemsize
                        + wk.size * wk.dtype.itemsize
                        + b2d.size * b2d.dtype.itemsize
                        + batch * OUT_FEATURES * 4),
    )

    kwargs = dict(tile_m=tile_m, grid=grid, batch=batch, cost=cost)
    out2d, last_exc = None, None
    for dim_sem in _candidate_semantics():
        try:
            out2d = _invoke(x, wk, b2d, dim_sem=dim_sem, **kwargs)
            break
        except Exception as exc:  # e.g. CORE_PARALLEL not supported -> fallback
            last_exc = exc
    if out2d is None:
        raise last_exc

    # unsqueeze(1): (B, 128) -> (B, 1, 128) is a zero-copy metadata reshape.
    return out2d.reshape(batch, 1, OUT_FEATURES)


def init_params(key):
    """Deterministic init matching torch.nn.Linear(768, 128) shapes.

    torch stores weight as (out, in); we keep it as (in, out) for the kernel,
    which is equivalent to x @ W^T in the PyTorch forward.
    """
    kw, kb = jax.random.split(key)
    bound = 1.0 / (IN_FEATURES ** 0.5)  # PyTorch default uniform bound
    w = jax.random.uniform(kw, (IN_FEATURES, OUT_FEATURES),
                           minval=-bound, maxval=bound, dtype=jnp.float32)
    b = jax.random.uniform(kb, (OUT_FEATURES,),
                           minval=-bound, maxval=bound, dtype=jnp.float32)
    return w, b


if __name__ == "__main__":
    key = jax.random.PRNGKey(0)
    k_in, k_params = jax.random.split(key)

    batch = 8
    raw_audio_emo = jax.random.normal(k_in, (batch, IN_FEATURES), dtype=jnp.float32)
    w, b = init_params(k_params)

    out = jax.block_until_ready(mlp_audio(raw_audio_emo, w, b))
    assert out.shape == (batch, 1, OUT_FEATURES), out.shape

    # Reference applying the same bf16 input/weight rounding the kernel uses.
    def ref_fn(x):
        xb = x.astype(jnp.bfloat16).astype(jnp.float32)
        wb = w.astype(jnp.bfloat16).astype(jnp.float32)
        return jnp.maximum(xb @ wb + b, 0.0)[:, None, :]

    assert jnp.allclose(out, ref_fn(raw_audio_emo), atol=2e-2, rtol=2e-2)
    # Loose sanity check against the full-f32 (torch-equivalent) forward.
    ref32 = jnp.maximum(raw_audio_emo @ w + b, 0.0)[:, None, :]
    assert jnp.allclose(out, ref32, atol=6e-2, rtol=6e-2)

    # Multi-tile path with a ragged last block (300 = 2*128 + 44), no padding.
    batch2 = 300
    x2 = jax.random.normal(jax.random.PRNGKey(1), (batch2, IN_FEATURES),
                           dtype=jnp.float32)
    out2 = jax.block_until_ready(mlp_audio(x2, w, b, tm=128))
    assert out2.shape == (batch2, 1, OUT_FEATURES), out2.shape
    assert jnp.allclose(out2, ref_fn(x2), atol=2e-2, rtol=2e-2)

    print("KERNEL_OK")
</pallas_src>

<mosaic_0001>
module attributes {stable_mosaic.version = 11 : i64} {
  func.func @_mlp_audio_kernel(%arg0: i32, %arg1: memref<8x768xbf16, #tpu.memory_space<vmem>>, %arg2: memref<768x128xbf16, #tpu.memory_space<vmem>>, %arg3: memref<1x128xf32, #tpu.memory_space<vmem>>, %arg4: memref<8x128xf32, #tpu.memory_space<vmem>>) attributes {dimension_semantics = [#tpu.dimension_semantics<core_parallel>], iteration_bounds = array<i64: 1>, scalar_prefetch = 0 : i64, scratch_operands = 0 : i64, tpu.core_type = #tpu.core_type<tc>, window_params = [{transform_indices = @transform_0, window_bounds = array<i64: 8, 768>}, {pipeline_mode = #tpu.pipeline_mode<synchronous>, transform_indices = @transform_1, window_bounds = array<i64: 768, 128>}, {pipeline_mode = #tpu.pipeline_mode<synchronous>, transform_indices = @transform_2, window_bounds = array<i64: 1, 128>}, {transform_indices = @transform_3, window_bounds = array<i64: 8, 128>}]} {
    %c0 = arith.constant 0 : index
    %c0_0 = arith.constant 0 : index
    %0 = vector.load %arg1[%c0, %c0_0] : memref<8x768xbf16, #tpu.memory_space<vmem>>, vector<8x768xbf16>
    %c0_1 = arith.constant 0 : index
    %c0_2 = arith.constant 0 : index
    %1 = vector.load %arg2[%c0_1, %c0_2] : memref<768x128xbf16, #tpu.memory_space<vmem>>, vector<768x128xbf16>
    %cst = arith.constant dense<0.000000e+00> : vector<8x128xf32>
    %2 = tpu.matmul %0, %1, %cst {dimension_numbers = #tpu.dot_dimension_numbers<[1], [0], [0], [1], [0, 0, 1, 1], [], []>} : vector<8x768xbf16>, vector<768x128xbf16>, vector<8x128xf32> -> vector<8x128xf32>
    %c0_3 = arith.constant 0 : index
    %c0_4 = arith.constant 0 : index
    %3 = vector.load %arg3[%c0_3, %c0_4] : memref<1x128xf32, #tpu.memory_space<vmem>>, vector<1x128xf32>
    %4 = vector.broadcast %3 : vector<1x128xf32> to vector<8x128xf32>
    %5 = arith.addf %2, %4 : vector<8x128xf32>
    %cst_5 = arith.constant 0.000000e+00 : f32
    %6 = vector.broadcast %cst_5 : f32 to vector<8x128xf32>
    %7 = arith.maximumf %5, %6 : vector<8x128xf32>
    %c0_6 = arith.constant 0 : index
    %c0_7 = arith.constant 0 : index
    %8 = vector.load %arg4[%c0_6, %c0_7] : memref<8x128xf32, #tpu.memory_space<vmem>>, vector<8x128xf32>
    tpu.vector_store %arg4[%c0_6, %c0_7], %7 {strides = array<i32>} : memref<8x128xf32, #tpu.memory_space<vmem>>, vector<8x128xf32>,
    return
  }
  func.func @transform_0(%arg0: i32) -> (i32, i32) {
    %c0_i32 = arith.constant 0 : i32
    %c0_i32_0 = arith.constant 0 : i32
    return %arg0, %c0_i32 : i32, i32
  }
  func.func @transform_1(%arg0: i32) -> (i32, i32) {
    %c0_i32 = arith.constant 0 : i32
    %c0_i32_0 = arith.constant 0 : i32
    %c0_i32_1 = arith.constant 0 : i32
    return %c0_i32, %c0_i32_0 : i32, i32
  }
  func.func @transform_2(%arg0: i32) -> (i32, i32) {
    %c0_i32 = arith.constant 0 : i32
    %c0_i32_0 = arith.constant 0 : i32
    %c0_i32_1 = arith.constant 0 : i32
    return %c0_i32, %c0_i32_0 : i32, i32
  }
  func.func @transform_3(%arg0: i32) -> (i32, i32) {
    %c0_i32 = arith.constant 0 : i32
    %c0_i32_0 = arith.constant 0 : i32
    return %arg0, %c0_i32 : i32, i32
  }
}

module attributes {stable_mosaic.version = 11 : i64} {
  func.func @_mlp_audio_kernel(%arg0: i32, %arg1: memref<8x768xbf16, #tpu.memory_space<vmem>>, %arg2: memref<768x128xbf16, #tpu.memory_space<vmem>>, %arg3: memref<1x128xf32, #tpu.memory_space<vmem>>, %arg4: memref<8x128xf32, #tpu.memory_space<vmem>>) attributes {dimension_semantics = [#tpu.dimension_semantics<parallel>], iteration_bounds = array<i64: 1>, scalar_prefetch = 0 : i64, scratch_operands = 0 : i64, tpu.core_type = #tpu.core_type<tc>, window_params = [{transform_indices = @transform_0, window_bounds = array<i64: 8, 768>}, {pipeline_mode = #tpu.pipeline_mode<synchronous>, transform_indices = @transform_1, window_bounds = array<i64: 768, 128>}, {pipeline_mode = #tpu.pipeline_mode<synchronous>, transform_indices = @transform_2, window_bounds = array<i64: 1, 128>}, {transform_indices = @transform_3, window_bounds = array<i64: 8, 128>}]} {
    %c0 = arith.constant 0 : index
    %c0_0 = arith.constant 0 : index
    %0 = vector.load %arg1[%c0, %c0_0] : memref<8x768xbf16, #tpu.memory_space<vmem>>, vector<8x768xbf16>
    %c0_1 = arith.constant 0 : index
    %c0_2 = arith.constant 0 : index
    %1 = vector.load %arg2[%c0_1, %c0_2] : memref<768x128xbf16, #tpu.memory_space<vmem>>, vector<768x128xbf16>
    %cst = arith.constant dense<0.000000e+00> : vector<8x128xf32>
    %2 = tpu.matmul %0, %1, %cst {dimension_numbers = #tpu.dot_dimension_numbers<[1], [0], [0], [1], [0, 0, 1, 1], [], []>} : vector<8x768xbf16>, vector<768x128xbf16>, vector<8x128xf32> -> vector<8x128xf32>
    %c0_3 = arith.constant 0 : index
    %c0_4 = arith.constant 0 : index
    %3 = vector.load %arg3[%c0_3, %c0_4] : memref<1x128xf32, #tpu.memory_space<vmem>>, vector<1x128xf32>
    %4 = vector.broadcast %3 : vector<1x128xf32> to vector<8x128xf32>
    %5 = arith.addf %2, %4 : vector<8x128xf32>
    %cst_5 = arith.constant 0.000000e+00 : f32
    %6 = vector.broadcast %cst_5 : f32 to vector<8x128xf32>
    %7 = arith.maximumf %5, %6 : vector<8x128xf32>
    %c0_6 = arith.constant 0 : index
    %c0_7 = arith.constant 0 : index
    %8 = vector.load %arg4[%c0_6, %c0_7] : memref<8x128xf32, #tpu.memory_space<vmem>>, vector<8x128xf32>
    tpu.vector_store %arg4[%c0_6, %c0_7], %7 {strides = array<i32>} : memref<8x128xf32, #tpu.memory_space<vmem>>, vector<8x128xf32>,
    return
  }
  func.func @transform_0(%arg0: i32) -> (i32, i32) {
    %c0_i32 = arith.constant 0 : i32
    %c0_i32_0 = arith.constant 0 : i32
    return %arg0, %c0_i32 : i32, i32
  }
  func.func @transform_1(%arg0: i32) -> (i32, i32) {
    %c0_i32 = arith.constant 0 : i32
    %c0_i32_0 = arith.constant 0 : i32
    %c0_i32_1 = arith.constant 0 : i32
    return %c0_i32, %c0_i32_0 : i32, i32
  }
  func.func @transform_2(%arg0: i32) -> (i32, i32) {
    %c0_i32 = arith.constant 0 : i32
    %c0_i32_0 = arith.constant 0 : i32
    %c0_i32_1 = arith.constant 0 : i32
    return %c0_i32, %c0_i32_0 : i32, i32
  }
  func.func @transform_3(%arg0: i32) -> (i32, i32) {
    %c0_i32 = arith.constant 0 : i32
    %c0_i32_0 = arith.constant 0 : i32
    return %arg0, %c0_i32 : i32, i32
  }
}

</mosaic_0001>

<llo_original>
// kernel: tpu_custom_call.1
$region0: #{tpu_custom_call.1}
  #allocation0 [shape = 'u32[]', space=smem, size = 0x4, offset = 0x4, fixed_abs, tag = 'smem constant byte address 0x4 - core index']
  #allocation1 [shape = 'u32[72,128]{1,0:T(1,128)}', space=vmem, size = 0x9000, scoped, tag = 'internal scratch']
  %s0 = inlined_call_operand.hbm [shape: bf16[8,768], index: 0, kind: input, shape index: {}]
  %s1 = inlined_call_operand.hbm [shape: bf16[768,128], index: 1, kind: input, shape index: {}]
  %s2 = inlined_call_operand.vmem [shape: f32[1,128], index: 2, kind: input, shape index: {}]
  %s3 = inlined_call_operand.hbm [shape: f32[8,128], index: 3, kind: output, shape index: {}]
  %s4 = sld [smem:[#allocation0]]
  $region30: #{tpu_custom_call.1} parent=0
    _
  %s6 = ssub.s32 1, %s4
  %s7 = scalar_select 0, %s6, %s4
  $region1: #{tpu_custom_call.1} parent=0
    #allocation2 [shape = 'u8[12288]{0}', space=vmem, size = 0x3000, scoped, tag = 'input window, operand 0, single buffered']
    #allocation3 [shape = 's32[1]{0}', space=sflag, size = 0x4, scoped, tag = 'scoped memory for tpu_custom_call.1']
    #allocation4 [shape = 's32[1]{0}', space=sflag, size = 0x4, scoped, tag = 'scoped memory for tpu_custom_call.1']
    #allocation5 [shape = 'u8[196608]{0}', space=vmem, size = 0x30000, scoped, tag = 'input window, operand 1, single buffered']
    #allocation6 [shape = 's32[1]{0}', space=sflag, size = 0x4, scoped, tag = 'scoped memory for tpu_custom_call.1']
    #allocation7 [shape = 'u8[4096]{0}', space=vmem, size = 0x1000, scoped, tag = 'output window, operand 0, single buffered']
    %8 = vsyncpa [#allocation3], 0
    %9 = vsyncpa [#allocation6], 0
    %10 = vsyncpa [#allocation4], 0
    // Predicated region
    $region2: #{tpu_custom_call.1} parent=1 // pred_check
      _
    $region3: #{tpu_custom_call.1} parent=1 // pred_check_branch
      %12 = sbr.rel (0) target = $region5
    $region4: #{tpu_custom_call.1} parent=1 // pred_region
      %14 = vsyncadd [#allocation3], 0
      %s15 = smul.addr %s7, 6
      %s16 = smul.addr %s15, 4
      %s17 = scalar_lea.hbm %s0, %s16
      %s19 = sshll.u32 %s17, 4
      %s20 = int_to_ptr.hbm [resolvable:$true] %s19
      %s21 = sshll.u32 [#allocation2], 4
      %s22 = int_to_ptr.vmem [resolvable:$true] %s21
      %24 = dma.hbm_to_vmem [thread:$0]  %s20, 384, %s22, [#allocation3]
    $region5: #{tpu_custom_call.1} parent=1 // pred_fallthru
      _
    // Predicated region
    $region6: #{tpu_custom_call.1} parent=1 // pred_check
      _
    $region7: #{tpu_custom_call.1} parent=1 // pred_check_branch
      %26 = sbr.rel (0) target = $region9
    $region8: #{tpu_custom_call.1} parent=1 // pred_region
      %28 = vsyncadd [#allocation6], 0
      %s29 = sshll.u32 %s1, 4
      %s30 = int_to_ptr.hbm [resolvable:$true] %s29
      %s31 = sshll.u32 [#allocation5], 4
      %s32 = int_to_ptr.vmem [resolvable:$true] %s31
      %37 = dma.hbm_to_vmem [thread:$0]  %s30, 6144, %s32, [#allocation6], 64, 64, 4
    $region9: #{tpu_custom_call.1} parent=1 // pred_fallthru
      _
    // Predicated region
    $region10: #{tpu_custom_call.1} parent=1 // pred_check
      _
    $region11: #{tpu_custom_call.1} parent=1 // pred_check_branch
      %39 = sbr.rel (0) target = $region13
    $region12: #{tpu_custom_call.1} parent=1 // pred_region
      _
    $region13: #{tpu_custom_call.1} parent=1 // pred_fallthru
      _
    // Predicated region
    $region14: #{tpu_custom_call.1} parent=1 // pred_check
      _
    $region15: #{tpu_custom_call.1} parent=1 // pred_check_branch
      %41 = sbr.rel (0) target = $region17
    $region16: #{tpu_custom_call.1} parent=1 // pred_region
      %43 = dma.done [#allocation3], 384
    $region17: #{tpu_custom_call.1} parent=1 // pred_fallthru
      _
    // Predicated region
    $region18: #{tpu_custom_call.1} parent=1 // pred_check
      _
    $region19: #{tpu_custom_call.1} parent=1 // pred_check_branch
      %45 = sbr.rel (0) target = $region21
    $region20: #{tpu_custom_call.1} parent=1 // pred_region
      %47 = dma.done [#allocation6], 6144
    $region21: #{tpu_custom_call.1} parent=1 // pred_fallthru
      _
    %v48 = vld [vmem:[#allocation2] sm:$0xff]
    %v49 = vld [vmem:[#allocation2 + $0x8] sm:$0xff]
    %v50 = vld [vmem:[#allocation2 + $0x10] sm:$0xff]
    %v51 = vld [vmem:[#allocation5] sm:$0xf]
    %v52 = vld [vmem:[#allocation5 + $0x4] sm:$0xf]
    %v53 = vld [vmem:[#allocation5 + $0x8] sm:$0xf]
    %v54 = vld [vmem:[#allocation5 + $0xc] sm:$0xf]
    %v55 = vld [vmem:[#allocation5 + $0x10] sm:$0xf]
    %v56 = vld [vmem:[#allocation5 + $0x14] sm:$0xf]
    %v57 = vld [vmem:[#allocation5 + $0x18] sm:$0xf]
    %v58 = vld [vmem:[#allocation5 + $0x1c] sm:$0xf]
    %v59 = vld [vmem:[#allocation5 + $0x20] sm:$0xf]
    %v60 = vld [vmem:[#allocation5 + $0x24] sm:$0xf]
    %v61 = vld [vmem:[#allocation5 + $0x28] sm:$0xf]
    %v62 = vld [vmem:[#allocation5 + $0x2c] sm:$0xf]
    %v63 = vld [vmem:[#allocation5 + $0x30] sm:$0xf]
    %v64 = vld [vmem:[#allocation5 + $0x34] sm:$0xf]
    %v65 = vld [vmem:[#allocation5 + $0x38] sm:$0xf]
    %v66 = vld [vmem:[#allocation5 + $0x3c] sm:$0xf]
    %v67 = vld [vmem:[#allocation5 + $0x40] sm:$0xf]
    %v68 = vld [vmem:[#allocation5 + $0x44] sm:$0xf]
    %v69 = vld [vmem:[#allocation5 + $0x48] sm:$0xf]
    %v70 = vld [vmem:[#allocation5 + $0x4c] sm:$0xf]
    %v71 = vld [vmem:[#allocation5 + $0x50] sm:$0xf]
    %v72 = vld [vmem:[#allocation5 + $0x54] sm:$0xf]
    %v73 = vld [vmem:[#allocation5 + $0x58] sm:$0xf]
    %v74 = vld [vmem:[#allocation5 + $0x5c] sm:$0xf]
    %v75 = vld [vmem:[#allocation5 + $0x60] sm:$0xf]
    %v76 = vld [vmem:[#allocation5 + $0x64] sm:$0xf]
    %v77 = vld [vmem:[#allocation5 + $0x68] sm:$0xf]
    %v78 = vld [vmem:[#allocation5 + $0x6c] sm:$0xf]
    %v79 = vld [vmem:[#allocation5 + $0x70] sm:$0xf]
    %v80 = vld [vmem:[#allocation5 + $0x74] sm:$0xf]
    %v81 = vld [vmem:[#allocation5 + $0x78] sm:$0xf]
    %v82 = vld [vmem:[#allocation5 + $0x7c] sm:$0xf]
    %v83 = vld [vmem:[#allocation5 + $0x80] sm:$0xf]
    %v84 = vld [vmem:[#allocation5 + $0x84] sm:$0xf]
    %v85 = vld [vmem:[#allocation5 + $0x88] sm:$0xf]
    %v86 = vld [vmem:[#allocation5 + $0x8c] sm:$0xf]
    %v87 = vld [vmem:[#allocation5 + $0x90] sm:$0xf]
    %v88 = vld [vmem:[#allocation5 + $0x94] sm:$0xf]
    %v89 = vld [vmem:[#allocation5 + $0x98] sm:$0xf]
    %v90 = vld [vmem:[#allocation5 + $0x9c] sm:$0xf]
    %v91 = vld [vmem:[#allocation5 + $0xa0] sm:$0xf]
    %v92 = vld [vmem:[#allocation5 + $0xa4] sm:$0xf]
    %v93 = vld [vmem:[#allocation5 + $0xa8] sm:$0xf]
    %v94 = vld [vmem:[#allocation5 + $0xac] sm:$0xf]
    %v95 = vld [vmem:[#allocation5 + $0xb0] sm:$0xf]
    %v96 = vld [vmem:[#allocation5 + $0xb4] sm:$0xf]
    %v97 = vld [vmem:[#allocation5 + $0xb8] sm:$0xf]
    %v98 = vld [vmem:[#allocation5 + $0xbc] sm:$0xf]
    %v99 = vld [vmem:[#allocation5 + $0xc0] sm:$0xf]
    %v100 = vld [vmem:[#allocation5 + $0xc4] sm:$0xf]
    %v101 = vld [vmem:[#allocation5 + $0xc8] sm:$0xf]
    %v102 = vld [vmem:[#allocation5 + $0xcc] sm:$0xf]
    %v103 = vld [vmem:[#allocation5 + $0xd0] sm:$0xf]
    %v104 = vld [vmem:[#allocation5 + $0xd4] sm:$0xf]
    %v105 = vld [vmem:[#allocation5 + $0xd8] sm:$0xf]
    %v106 = vld [vmem:[#allocation5 + $0xdc] sm:$0xf]
    %v107 = vld [vmem:[#allocation5 + $0xe0] sm:$0xf]
    %v108 = vld [vmem:[#allocation5 + $0xe4] sm:$0xf]
    %v109 = vld [vmem:[#allocation5 + $0xe8] sm:$0xf]
    %v110 = vld [vmem:[#allocation5 + $0xec] sm:$0xf]
    %v111 = vld [vmem:[#allocation5 + $0xf0] sm:$0xf]
    %v112 = vld [vmem:[#allocation5 + $0xf4] sm:$0xf]
    %v113 = vld [vmem:[#allocation5 + $0xf8] sm:$0xf]
    %v114 = vld [vmem:[#allocation5 + $0xfc] sm:$0xf]
    %v115 = vld [vmem:[#allocation5 + $0x100] sm:$0xf]
    %v116 = vld [vmem:[#allocation5 + $0x104] sm:$0xf]
    %v117 = vld [vmem:[#allocation5 + $0x108] sm:$0xf]
    %v118 = vld [vmem:[#allocation5 + $0x10c] sm:$0xf]
    %v119 = vld [vmem:[#allocation5 + $0x110] sm:$0xf]
    %v120 = vld [vmem:[#allocation5 + $0x114] sm:$0xf]
    %v121 = vld [vmem:[#allocation5 + $0x118] sm:$0xf]
    %v122 = vld [vmem:[#allocation5 + $0x11c] sm:$0xf]
    %v123 = vld [vmem:[#allocation5 + $0x120] sm:$0xf]
    %v124 = vld [vmem:[#allocation5 + $0x124] sm:$0xf]
    %v125 = vld [vmem:[#allocation5 + $0x128] sm:$0xf]
    %v126 = vld [vmem:[#allocation5 + $0x12c] sm:$0xf]
    %v127 = vld [vmem:[#allocation5 + $0x130] sm:$0xf]
    %v128 = vld [vmem:[#allocation5 + $0x134] sm:$0xf]
    %v129 = vld [vmem:[#allocation5 + $0x138] sm:$0xf]
    %v130 = vld [vmem:[#allocation5 + $0x13c] sm:$0xf]
    %v131 = vld [vmem:[#allocation5 + $0x140] sm:$0xf]
    %v132 = vld [vmem:[#allocation5 + $0x144] sm:$0xf]
    %v133 = vld [vmem:[#allocation5 + $0x148] sm:$0xf]
    %v134 = vld [vmem:[#allocation5 + $0x14c] sm:$0xf]
    %v135 = vld [vmem:[#allocation5 + $0x150] sm:$0xf]
    %v136 = vld [vmem:[#allocation5 + $0x154] sm:$0xf]
    %v137 = vld [vmem:[#allocation5 + $0x158] sm:$0xf]
    %v138 = vld [vmem:[#allocation5 + $0x15c] sm:$0xf]
    %v139 = vld [vmem:[#allocation5 + $0x160] sm:$0xf]
    %v140 = vld [vmem:[#allocation5 + $0x164] sm:$0xf]
    %v141 = vld [vmem:[#allocation5 + $0x168] sm:$0xf]
    %v142 = vld [vmem:[#allocation5 + $0x16c] sm:$0xf]
    %v143 = vld [vmem:[#allocation5 + $0x170] sm:$0xf]
    %v144 = vld [vmem:[#allocation5 + $0x174] sm:$0xf]
    %v145 = vld [vmem:[#allocation5 + $0x178] sm:$0xf]
    %v146 = vld [vmem:[#allocation5 + $0x17c] sm:$0xf]
    %v147 = vld [vmem:[%s2] sm:$0x1]
    %v149 = vperm.slane %v147, 0
    %v154 = vunpack.c.l.b16 %v48
    %v155 = vunpack.c.h.b16 %v48
    %v156 = vunpack.c.l.b16 %v49
    %v157 = vunpack.c.h.b16 %v49
    %v158 = vunpack.c.l.b16 %v50
    %v159 = vunpack.c.h.b16 %v50
    %v160 = vpack.c.b16 %v154, %v154
    %v161 = vpack.c.b16 %v155, %v155
    %v162 = vpack.c.b16 %v156, %v156
    %v163 = vpack.c.b16 %v157, %v157
    %v164 = vpack.c.b16 %v158, %v158
    %v165 = vpack.c.b16 %v159, %v159
    %v268 = vunpack.c.l.b16 %v51
    %v269 = vunpack.c.l.b16 %v52
    %v270 = vunpack.c.l.b16 %v53
    %v271 = vunpack.c.l.b16 %v54
    %v272 = vunpack.c.l.b16 %v55
    %v273 = vunpack.c.l.b16 %v56
    %v274 = vunpack.c.l.b16 %v57
    %v275 = vunpack.c.l.b16 %v58
    %v276 = vunpack.c.l.b16 %v59
    %v277 = vunpack.c.l.b16 %v60
    %v278 = vunpack.c.l.b16 %v61
    %v279 = vunpack.c.l.b16 %v62
    %v280 = vunpack.c.l.b16 %v63
    %v281 = vunpack.c.l.b16 %v64
    %v282 = vunpack.c.l.b16 %v65
    %v283 = vunpack.c.l.b16 %v66
    %v284 = vunpack.c.l.b16 %v67
    %v285 = vunpack.c.l.b16 %v68
    %v286 = vunpack.c.l.b16 %v69
    %v287 = vunpack.c.l.b16 %v70
    %v288 = vunpack.c.l.b16 %v71
    %v289 = vunpack.c.l.b16 %v72
    %v290 = vunpack.c.l.b16 %v73
    %v291 = vunpack.c.l.b16 %v74
    %v292 = vunpack.c.l.b16 %v75
    %v293 = vunpack.c.l.b16 %v76
    %v294 = vunpack.c.l.b16 %v77
    %v295 = vunpack.c.l.b16 %v78
    %v296 = vunpack.c.l.b16 %v79
    %v297 = vunpack.c.l.b16 %v80
    %v298 = vunpack.c.l.b16 %v81
    %v299 = vunpack.c.l.b16 %v82
    %v300 = vunpack.c.l.b16 %v83
    %v301 = vunpack.c.l.b16 %v84
    %v302 = vunpack.c.l.b16 %v85
    %v303 = vunpack.c.l.b16 %v86
    %v304 = vunpack.c.l.b16 %v87
    %v305 = vunpack.c.l.b16 %v88
    %v306 = vunpack.c.l.b16 %v89
    %v307 = vunpack.c.l.b16 %v90
    %v308 = vunpack.c.l.b16 %v91
    %v309 = vunpack.c.l.b16 %v92
    %v310 = vunpack.c.l.b16 %v93
    %v311 = vunpack.c.l.b16 %v94
    %v312 = vunpack.c.l.b16 %v95
    %v313 = vunpack.c.l.b16 %v96
    %v314 = vunpack.c.l.b16 %v97
    %v315 = vunpack.c.l.b16 %v98
    %v316 = vunpack.c.l.b16 %v99
    %v317 = vunpack.c.l.b16 %v100
    %v318 = vunpack.c.l.b16 %v101
    %v319 = vunpack.c.l.b16 %v102
    %v320 = vunpack.c.l.b16 %v103
    %v321 = vunpack.c.l.b16 %v104
    %v322 = vunpack.c.l.b16 %v105
    %v323 = vunpack.c.l.b16 %v106
    %v324 = vunpack.c.l.b16 %v107
    %v325 = vunpack.c.l.b16 %v108
    %v326 = vunpack.c.l.b16 %v109
    %v327 = vunpack.c.l.b16 %v110
    %v328 = vunpack.c.l.b16 %v111
    %v329 = vunpack.c.l.b16 %v112
    %v330 = vunpack.c.l.b16 %v113
    %v331 = vunpack.c.l.b16 %v114
    %v332 = vunpack.c.l.b16 %v115
    %v333 = vunpack.c.l.b16 %v116
    %v334 = vunpack.c.l.b16 %v117
    %v335 = vunpack.c.l.b16 %v118
    %v336 = vunpack.c.l.b16 %v119
    %v337 = vunpack.c.l.b16 %v120
    %v338 = vunpack.c.l.b16 %v121
    %v339 = vunpack.c.l.b16 %v122
    %v340 = vunpack.c.l.b16 %v123
    %v341 = vunpack.c.l.b16 %v124
    %v342 = vunpack.c.l.b16 %v125
    %v343 = vunpack.c.l.b16 %v126
    %v344 = vunpack.c.l.b16 %v127
    %v345 = vunpack.c.l.b16 %v128
    %v346 = vunpack.c.l.b16 %v129
    %v347 = vunpack.c.l.b16 %v130
    %v348 = vunpack.c.l.b16 %v131
    %v349 = vunpack.c.l.b16 %v132
    %v350 = vunpack.c.l.b16 %v133
    %v351 = vunpack.c.l.b16 %v134
    %v352 = vunpack.c.l.b16 %v135
    %v353 = vunpack.c.l.b16 %v136
    %v354 = vunpack.c.l.b16 %v137
    %v355 = vunpack.c.l.b16 %v138
    %v356 = vunpack.c.l.b16 %v139
    %v357 = vunpack.c.l.b16 %v140
    %v358 = vunpack.c.l.b16 %v141
    %v359 = vunpack.c.l.b16 %v142
    %v360 = vunpack.c.l.b16 %v143
    %v361 = vunpack.c.l.b16 %v144
    %v362 = vunpack.c.l.b16 %v145
    %v363 = vunpack.c.l.b16 %v146
    %v364 = vpack.c.b16 %v269, %v268
    %v365 = vpack.c.b16 %v271, %v270
    %v366 = vpack.c.b16 %v273, %v272
    %v367 = vpack.c.b16 %v275, %v274
    %v368 = vpack.c.b16 %v277, %v276
    %v369 = vpack.c.b16 %v279, %v278
    %v370 = vpack.c.b16 %v281, %v280
    %v371 = vpack.c.b16 %v283, %v282
    %v372 = vpack.c.b16 %v285, %v284
    %v373 = vpack.c.b16 %v287, %v286
    %v374 = vpack.c.b16 %v289, %v288
    %v375 = vpack.c.b16 %v291, %v290
    %v376 = vpack.c.b16 %v293, %v292
    %v377 = vpack.c.b16 %v295, %v294
    %v378 = vpack.c.b16 %v297, %v296
    %v379 = vpack.c.b16 %v299, %v298
    %v380 = vpack.c.b16 %v301, %v300
    %v381 = vpack.c.b16 %v303, %v302
    %v382 = vpack.c.b16 %v305, %v304
    %v383 = vpack.c.b16 %v307, %v306
    %v384 = vpack.c.b16 %v309, %v308
    %v385 = vpack.c.b16 %v311, %v310
    %v386 = vpack.c.b16 %v313, %v312
    %v387 = vpack.c.b16 %v315, %v314
    %v388 = vpack.c.b16 %v317, %v316
    %v389 = vpack.c.b16 %v319, %v318
    %v390 = vpack.c.b16 %v321, %v320
    %v391 = vpack.c.b16 %v323, %v322
    %v392 = vpack.c.b16 %v325, %v324
    %v393 = vpack.c.b16 %v327, %v326
    %v394 = vpack.c.b16 %v329, %v328
    %v395 = vpack.c.b16 %v331, %v330
    %v396 = vpack.c.b16 %v333, %v332
    %v397 = vpack.c.b16 %v335, %v334
    %v398 = vpack.c.b16 %v337, %v336
    %v399 = vpack.c.b16 %v339, %v338
    %v400 = vpack.c.b16 %v341, %v340
    %v401 = vpack.c.b16 %v343, %v342
    %v402 = vpack.c.b16 %v345, %v344
    %v403 = vpack.c.b16 %v347, %v346
    %v404 = vpack.c.b16 %v349, %v348
    %v405 = vpack.c.b16 %v351, %v350
    %v406 = vpack.c.b16 %v353, %v352
    %v407 = vpack.c.b16 %v355, %v354
    %v408 = vpack.c.b16 %v357, %v356
    %v409 = vpack.c.b16 %v359, %v358
    %v410 = vpack.c.b16 %v361, %v360
    %v411 = vpack.c.b16 %v363, %v362
    %460 = vmatpush.bf16.msra.mxu0 %v371
    %461 = vmatpush.bf16.msra.mxu0 %v370
    %462 = vmatpush.bf16.msra.mxu0 %v369
    %463 = vmatpush.bf16.msra.mxu0 %v368
    %464 = vmatpush.bf16.msra.mxu0 %v367
    %465 = vmatpush.bf16.msra.mxu0 %v366
    %466 = vmatpush.bf16.msra.mxu0 %v365
    %467 = vmatpush.bf16.msra.mxu0 %v364
    %468 = vmatmul.bf16.gmra.mxu0 %v160
    %v469 = vpop.f32.mrf.mxu0
    %v470 = vadd.f32 %v149, %v469
    %v471 = vpop.f32.mrf.mxu0
    %472 = vdwg.mxu0
    %473 = vmatpush.bf16.msra.mxu0 %v379
    %474 = vmatpush.bf16.msra.mxu0 %v378
    %475 = vmatpush.bf16.msra.mxu0 %v377
    %476 = vmatpush.bf16.msra.mxu0 %v376
    %477 = vmatpush.bf16.msra.mxu0 %v375
    %478 = vmatpush.bf16.msra.mxu0 %v374
    %479 = vmatpush.bf16.msra.mxu0 %v373
    %480 = vmatpush.bf16.msra.mxu0 %v372
    %481 = vmatmul.bf16.gmra.mxu0 %v161
    %v482 = vpop.f32.mrf.mxu0
    %v483 = vadd.f32 %v470, %v482
    %v484 = vpop.f32.mrf.mxu0
    %485 = vdwg.mxu0
    %486 = vmatpush.bf16.msra.mxu0 %v387
    %487 = vmatpush.bf16.msra.mxu0 %v386
    %488 = vmatpush.bf16.msra.mxu0 %v385
    %489 = vmatpush.bf16.msra.mxu0 %v384
    %490 = vmatpush.bf16.msra.mxu0 %v383
    %491 = vmatpush.bf16.msra.mxu0 %v382
    %492 = vmatpush.bf16.msra.mxu0 %v381
    %493 = vmatpush.bf16.msra.mxu0 %v380
    %494 = vmatmul.bf16.gmra.mxu0 %v162
    %v495 = vpop.f32.mrf.mxu0
    %v496 = vadd.f32 %v483, %v495
    %v497 = vpop.f32.mrf.mxu0
    %498 = vdwg.mxu0
    %499 = vmatpush.bf16.msra.mxu0 %v395
    %500 = vmatpush.bf16.msra.mxu0 %v394
    %501 = vmatpush.bf16.msra.mxu0 %v393
    %502 = vmatpush.bf16.msra.mxu0 %v392
    %503 = vmatpush.bf16.msra.mxu0 %v391
    %504 = vmatpush.bf16.msra.mxu0 %v390
    %505 = vmatpush.bf16.msra.mxu0 %v389
    %506 = vmatpush.bf16.msra.mxu0 %v388
    %507 = vmatmul.bf16.gmra.mxu0 %v163
    %v508 = vpop.f32.mrf.mxu0
    %v509 = vadd.f32 %v496, %v508
    %v510 = vpop.f32.mrf.mxu0
    %511 = vdwg.mxu0
    %512 = vmatpush.bf16.msra.mxu0 %v403
    %513 = vmatpush.bf16.msra.mxu0 %v402
    %514 = vmatpush.bf16.msra.mxu0 %v401
    %515 = vmatpush.bf16.msra.mxu0 %v400
    %516 = vmatpush.bf16.msra.mxu0 %v399
    %517 = vmatpush.bf16.msra.mxu0 %v398
    %518 = vmatpush.bf16.msra.mxu0 %v397
    %519 = vmatpush.bf16.msra.mxu0 %v396
    %520 = vmatmul.bf16.gmra.mxu0 %v164
    %v521 = vpop.f32.mrf.mxu0
    %v522 = vadd.f32 %v509, %v521
    %v523 = vpop.f32.mrf.mxu0
    %524 = vdwg.mxu0
    %525 = vmatpush.bf16.msra.mxu0 %v411
    %526 = vmatpush.bf16.msra.mxu0 %v410
    %527 = vmatpush.bf16.msra.mxu0 %v409
    %528 = vmatpush.bf16.msra.mxu0 %v408
    %529 = vmatpush.bf16.msra.mxu0 %v407
    %530 = vmatpush.bf16.msra.mxu0 %v406
    %531 = vmatpush.bf16.msra.mxu0 %v405
    %532 = vmatpush.bf16.msra.mxu0 %v404
    %533 = vmatmul.bf16.gmra.mxu0 %v165
    %v534 = vpop.f32.mrf.mxu0
    %v535 = vadd.f32 %v522, %v534
    %v536 = vpop.f32.mrf.mxu0
    %537 = vdwg.mxu0
    %v538 = vmax.f32 %v535, 0.0
    %539 = vst [vmem:[#allocation7] sm:$0xff] %v538
    // Predicated region
    $region22: #{tpu_custom_call.1} parent=1 // pred_check
      _
    $region23: #{tpu_custom_call.1} parent=1 // pred_check_branch
      %541 = sbr.rel (0) target = $region25
    $region24: #{tpu_custom_call.1} parent=1 // pred_region
      %543 = vsyncadd [#allocation4], 0
      %s544 = smul.addr %s7, 8
      %s545 = scalar_lea.hbm %s3, %s544
      %s547 = sshll.u32 [#allocation7], 4
      %s548 = int_to_ptr.vmem [resolvable:$true] %s547
      %s549 = sshll.u32 %s545, 4
      %s550 = int_to_ptr.hbm [resolvable:$true] %s549
      %552 = dma.vmem_to_hbm [thread:$0]  %s548, 128, %s550, [#allocation4]
    $region25: #{tpu_custom_call.1} parent=1 // pred_fallthru
      _
    // Predicated region
    $region26: #{tpu_custom_call.1} parent=1 // pred_check
      _
    $region27: #{tpu_custom_call.1} parent=1 // pred_check_branch
      %554 = sbr.rel (0) target = $region29
    $region28: #{tpu_custom_call.1} parent=1 // pred_region
      %556 = dma.done [#allocation4], 128
    $region29: #{tpu_custom_call.1} parent=1 // pred_fallthru
      _
    %557 = vsyncpa [#allocation3], 1
    %558 = vsyncpa [#allocation6], 1
    %559 = vsyncpa [#allocation4], 1

// kernel: tpu_custom_call.1
$region0: #{tpu_custom_call.1}
  #allocation0 [shape = 'u32[]', space=smem, size = 0x4, offset = 0x4, fixed_abs, tag = 'smem constant byte address 0x4 - core index']
  #allocation1 [shape = 'u32[72,128]{1,0:T(1,128)}', space=vmem, size = 0x9000, scoped, tag = 'internal scratch']
  %s0 = inlined_call_operand.hbm [shape: bf16[8,768], index: 0, kind: input, shape index: {}]
  %s1 = inlined_call_operand.hbm [shape: bf16[768,128], index: 1, kind: input, shape index: {}]
  %s2 = inlined_call_operand.vmem [shape: f32[1,128], index: 2, kind: input, shape index: {}]
  %s3 = inlined_call_operand.hbm [shape: f32[8,128], index: 3, kind: output, shape index: {}]
  %s4 = sld [smem:[#allocation0]]
  $region30: #{tpu_custom_call.1} parent=0
    _
  %s6 = ssub.s32 1, %s4
  %s7 = scalar_select 0, %s6, %s4
  $region1: #{tpu_custom_call.1} parent=0
    #allocation2 [shape = 'u8[12288]{0}', space=vmem, size = 0x3000, scoped, tag = 'input window, operand 0, single buffered']
    #allocation3 [shape = 's32[1]{0}', space=sflag, size = 0x4, scoped, tag = 'scoped memory for tpu_custom_call.1']
    #allocation4 [shape = 's32[1]{0}', space=sflag, size = 0x4, scoped, tag = 'scoped memory for tpu_custom_call.1']
    #allocation5 [shape = 'u8[196608]{0}', space=vmem, size = 0x30000, scoped, tag = 'input window, operand 1, single buffered']
    #allocation6 [shape = 's32[1]{0}', space=sflag, size = 0x4, scoped, tag = 'scoped memory for tpu_custom_call.1']
    #allocation7 [shape = 'u8[4096]{0}', space=vmem, size = 0x1000, scoped, tag = 'output window, operand 0, single buffered']
    %8 = vsyncpa [#allocation3], 0
    %9 = vsyncpa [#allocation6], 0
    %10 = vsyncpa [#allocation4], 0
    // Predicated region
    $region2: #{tpu_custom_call.1} parent=1 // pred_check
      _
    $region3: #{tpu_custom_call.1} parent=1 // pred_check_branch
      %12 = sbr.rel (0) target = $region5
    $region4: #{tpu_custom_call.1} parent=1 // pred_region
      %14 = vsyncadd [#allocation3], 0
      %s16 = sshll.u32 %s0, 4
      %s17 = int_to_ptr.hbm [resolvable:$true] %s16
      %s18 = sshll.u32 [#allocation2], 4
      %s19 = int_to_ptr.vmem [resolvable:$true] %s18
      %21 = dma.hbm_to_vmem [thread:$0]  %s17, 384, %s19, [#allocation3]
    $region5: #{tpu_custom_call.1} parent=1 // pred_fallthru
      _
    // Predicated region
    $region6: #{tpu_custom_call.1} parent=1 // pred_check
      _
    $region7: #{tpu_custom_call.1} parent=1 // pred_check_branch
      %23 = sbr.rel (0) target = $region9
    $region8: #{tpu_custom_call.1} parent=1 // pred_region
      %25 = vsyncadd [#allocation6], 0
      %s26 = sshll.u32 %s1, 4
      %s27 = int_to_ptr.hbm [resolvable:$true] %s26
      %s28 = sshll.u32 [#allocation5], 4
      %s29 = int_to_ptr.vmem [resolvable:$true] %s28
      %34 = dma.hbm_to_vmem [thread:$0]  %s27, 6144, %s29, [#allocation6], 64, 64, 4
    $region9: #{tpu_custom_call.1} parent=1 // pred_fallthru
      _
    // Predicated region
    $region10: #{tpu_custom_call.1} parent=1 // pred_check
      _
    $region11: #{tpu_custom_call.1} parent=1 // pred_check_branch
      %36 = sbr.rel (0) target = $region13
    $region12: #{tpu_custom_call.1} parent=1 // pred_region
      _
    $region13: #{tpu_custom_call.1} parent=1 // pred_fallthru
      _
    // Predicated region
    $region14: #{tpu_custom_call.1} parent=1 // pred_check
      _
    $region15: #{tpu_custom_call.1} parent=1 // pred_check_branch
      %38 = sbr.rel (0) target = $region17
    $region16: #{tpu_custom_call.1} parent=1 // pred_region
      %40 = dma.done [#allocation3], 384
    $region17: #{tpu_custom_call.1} parent=1 // pred_fallthru
      _
    // Predicated region
    $region18: #{tpu_custom_call.1} parent=1 // pred_check
      _
    $region19: #{tpu_custom_call.1} parent=1 // pred_check_branch
      %42 = sbr.rel (0) target = $region21
    $region20: #{tpu_custom_call.1} parent=1 // pred_region
      %44 = dma.done [#allocation6], 6144
    $region21: #{tpu_custom_call.1} parent=1 // pred_fallthru
      _
    %v45 = vld [vmem:[#allocation2] sm:$0xff]
    %v46 = vld [vmem:[#allocation2 + $0x8] sm:$0xff]
    %v47 = vld [vmem:[#allocation2 + $0x10] sm:$0xff]
    %v48 = vld [vmem:[#allocation5] sm:$0xf]
    %v49 = vld [vmem:[#allocation5 + $0x4] sm:$0xf]
    %v50 = vld [vmem:[#allocation5 + $0x8] sm:$0xf]
    %v51 = vld [vmem:[#allocation5 + $0xc] sm:$0xf]
    %v52 = vld [vmem:[#allocation5 + $0x10] sm:$0xf]
    %v53 = vld [vmem:[#allocation5 + $0x14] sm:$0xf]
    %v54 = vld [vmem:[#allocation5 + $0x18] sm:$0xf]
    %v55 = vld [vmem:[#allocation5 + $0x1c] sm:$0xf]
    %v56 = vld [vmem:[#allocation5 + $0x20] sm:$0xf]
    %v57 = vld [vmem:[#allocation5 + $0x24] sm:$0xf]
    %v58 = vld [vmem:[#allocation5 + $0x28] sm:$0xf]
    %v59 = vld [vmem:[#allocation5 + $0x2c] sm:$0xf]
    %v60 = vld [vmem:[#allocation5 + $0x30] sm:$0xf]
    %v61 = vld [vmem:[#allocation5 + $0x34] sm:$0xf]
    %v62 = vld [vmem:[#allocation5 + $0x38] sm:$0xf]
    %v63 = vld [vmem:[#allocation5 + $0x3c] sm:$0xf]
    %v64 = vld [vmem:[#allocation5 + $0x40] sm:$0xf]
    %v65 = vld [vmem:[#allocation5 + $0x44] sm:$0xf]
    %v66 = vld [vmem:[#allocation5 + $0x48] sm:$0xf]
    %v67 = vld [vmem:[#allocation5 + $0x4c] sm:$0xf]
    %v68 = vld [vmem:[#allocation5 + $0x50] sm:$0xf]
    %v69 = vld [vmem:[#allocation5 + $0x54] sm:$0xf]
    %v70 = vld [vmem:[#allocation5 + $0x58] sm:$0xf]
    %v71 = vld [vmem:[#allocation5 + $0x5c] sm:$0xf]
    %v72 = vld [vmem:[#allocation5 + $0x60] sm:$0xf]
    %v73 = vld [vmem:[#allocation5 + $0x64] sm:$0xf]
    %v74 = vld [vmem:[#allocation5 + $0x68] sm:$0xf]
    %v75 = vld [vmem:[#allocation5 + $0x6c] sm:$0xf]
    %v76 = vld [vmem:[#allocation5 + $0x70] sm:$0xf]
    %v77 = vld [vmem:[#allocation5 + $0x74] sm:$0xf]
    %v78 = vld [vmem:[#allocation5 + $0x78] sm:$0xf]
    %v79 = vld [vmem:[#allocation5 + $0x7c] sm:$0xf]
    %v80 = vld [vmem:[#allocation5 + $0x80] sm:$0xf]
    %v81 = vld [vmem:[#allocation5 + $0x84] sm:$0xf]
    %v82 = vld [vmem:[#allocation5 + $0x88] sm:$0xf]
    %v83 = vld [vmem:[#allocation5 + $0x8c] sm:$0xf]
    %v84 = vld [vmem:[#allocation5 + $0x90] sm:$0xf]
    %v85 = vld [vmem:[#allocation5 + $0x94] sm:$0xf]
    %v86 = vld [vmem:[#allocation5 + $0x98] sm:$0xf]
    %v87 = vld [vmem:[#allocation5 + $0x9c] sm:$0xf]
    %v88 = vld [vmem:[#allocation5 + $0xa0] sm:$0xf]
    %v89 = vld [vmem:[#allocation5 + $0xa4] sm:$0xf]
    %v90 = vld [vmem:[#allocation5 + $0xa8] sm:$0xf]
    %v91 = vld [vmem:[#allocation5 + $0xac] sm:$0xf]
    %v92 = vld [vmem:[#allocation5 + $0xb0] sm:$0xf]
    %v93 = vld [vmem:[#allocation5 + $0xb4] sm:$0xf]
    %v94 = vld [vmem:[#allocation5 + $0xb8] sm:$0xf]
    %v95 = vld [vmem:[#allocation5 + $0xbc] sm:$0xf]
    %v96 = vld [vmem:[#allocation5 + $0xc0] sm:$0xf]
    %v97 = vld [vmem:[#allocation5 + $0xc4] sm:$0xf]
    %v98 = vld [vmem:[#allocation5 + $0xc8] sm:$0xf]
    %v99 = vld [vmem:[#allocation5 + $0xcc] sm:$0xf]
    %v100 = vld [vmem:[#allocation5 + $0xd0] sm:$0xf]
    %v101 = vld [vmem:[#allocation5 + $0xd4] sm:$0xf]
    %v102 = vld [vmem:[#allocation5 + $0xd8] sm:$0xf]
    %v103 = vld [vmem:[#allocation5 + $0xdc] sm:$0xf]
    %v104 = vld [vmem:[#allocation5 + $0xe0] sm:$0xf]
    %v105 = vld [vmem:[#allocation5 + $0xe4] sm:$0xf]
    %v106 = vld [vmem:[#allocation5 + $0xe8] sm:$0xf]
    %v107 = vld [vmem:[#allocation5 + $0xec] sm:$0xf]
    %v108 = vld [vmem:[#allocation5 + $0xf0] sm:$0xf]
    %v109 = vld [vmem:[#allocation5 + $0xf4] sm:$0xf]
    %v110 = vld [vmem:[#allocation5 + $0xf8] sm:$0xf]
    %v111 = vld [vmem:[#allocation5 + $0xfc] sm:$0xf]
    %v112 = vld [vmem:[#allocation5 + $0x100] sm:$0xf]
    %v113 = vld [vmem:[#allocation5 + $0x104] sm:$0xf]
    %v114 = vld [vmem:[#allocation5 + $0x108] sm:$0xf]
    %v115 = vld [vmem:[#allocation5 + $0x10c] sm:$0xf]
    %v116 = vld [vmem:[#allocation5 + $0x110] sm:$0xf]
    %v117 = vld [vmem:[#allocation5 + $0x114] sm:$0xf]
    %v118 = vld [vmem:[#allocation5 + $0x118] sm:$0xf]
    %v119 = vld [vmem:[#allocation5 + $0x11c] sm:$0xf]
    %v120 = vld [vmem:[#allocation5 + $0x120] sm:$0xf]
    %v121 = vld [vmem:[#allocation5 + $0x124] sm:$0xf]
    %v122 = vld [vmem:[#allocation5 + $0x128] sm:$0xf]
    %v123 = vld [vmem:[#allocation5 + $0x12c] sm:$0xf]
    %v124 = vld [vmem:[#allocation5 + $0x130] sm:$0xf]
    %v125 = vld [vmem:[#allocation5 + $0x134] sm:$0xf]
    %v126 = vld [vmem:[#allocation5 + $0x138] sm:$0xf]
    %v127 = vld [vmem:[#allocation5 + $0x13c] sm:$0xf]
    %v128 = vld [vmem:[#allocation5 + $0x140] sm:$0xf]
    %v129 = vld [vmem:[#allocation5 + $0x144] sm:$0xf]
    %v130 = vld [vmem:[#allocation5 + $0x148] sm:$0xf]
    %v131 = vld [vmem:[#allocation5 + $0x14c] sm:$0xf]
    %v132 = vld [vmem:[#allocation5 + $0x150] sm:$0xf]
    %v133 = vld [vmem:[#allocation5 + $0x154] sm:$0xf]
    %v134 = vld [vmem:[#allocation5 + $0x158] sm:$0xf]
    %v135 = vld [vmem:[#allocation5 + $0x15c] sm:$0xf]
    %v136 = vld [vmem:[#allocation5 + $0x160] sm:$0xf]
    %v137 = vld [vmem:[#allocation5 + $0x164] sm:$0xf]
    %v138 = vld [vmem:[#allocation5 + $0x168] sm:$0xf]
    %v139 = vld [vmem:[#allocation5 + $0x16c] sm:$0xf]
    %v140 = vld [vmem:[#allocation5 + $0x170] sm:$0xf]
    %v141 = vld [vmem:[#allocation5 + $0x174] sm:$0xf]
    %v142 = vld [vmem:[#allocation5 + $0x178] sm:$0xf]
    %v143 = vld [vmem:[#allocation5 + $0x17c] sm:$0xf]
    %v144 = vld [vmem:[%s2] sm:$0x1]
    %v146 = vperm.slane %v144, 0
    %v151 = vunpack.c.l.b16 %v45
    %v152 = vunpack.c.h.b16 %v45
    %v153 = vunpack.c.l.b16 %v46
    %v154 = vunpack.c.h.b16 %v46
    %v155 = vunpack.c.l.b16 %v47
    %v156 = vunpack.c.h.b16 %v47
    %v157 = vpack.c.b16 %v151, %v151
    %v158 = vpack.c.b16 %v152, %v152
    %v159 = vpack.c.b16 %v153, %v153
    %v160 = vpack.c.b16 %v154, %v154
    %v161 = vpack.c.b16 %v155, %v155
    %v162 = vpack.c.b16 %v156, %v156
    %v265 = vunpack.c.l.b16 %v48
    %v266 = vunpack.c.l.b16 %v49
    %v267 = vunpack.c.l.b16 %v50
    %v268 = vunpack.c.l.b16 %v51
    %v269 = vunpack.c.l.b16 %v52
    %v270 = vunpack.c.l.b16 %v53
    %v271 = vunpack.c.l.b16 %v54
    %v272 = vunpack.c.l.b16 %v55
    %v273 = vunpack.c.l.b16 %v56
    %v274 = vunpack.c.l.b16 %v57
    %v275 = vunpack.c.l.b16 %v58
    %v276 = vunpack.c.l.b16 %v59
    %v277 = vunpack.c.l.b16 %v60
    %v278 = vunpack.c.l.b16 %v61
    %v279 = vunpack.c.l.b16 %v62
    %v280 = vunpack.c.l.b16 %v63
    %v281 = vunpack.c.l.b16 %v64
    %v282 = vunpack.c.l.b16 %v65
    %v283 = vunpack.c.l.b16 %v66
    %v284 = vunpack.c.l.b16 %v67
    %v285 = vunpack.c.l.b16 %v68
    %v286 = vunpack.c.l.b16 %v69
    %v287 = vunpack.c.l.b16 %v70
    %v288 = vunpack.c.l.b16 %v71
    %v289 = vunpack.c.l.b16 %v72
    %v290 = vunpack.c.l.b16 %v73
    %v291 = vunpack.c.l.b16 %v74
    %v292 = vunpack.c.l.b16 %v75
    %v293 = vunpack.c.l.b16 %v76
    %v294 = vunpack.c.l.b16 %v77
    %v295 = vunpack.c.l.b16 %v78
    %v296 = vunpack.c.l.b16 %v79
    %v297 = vunpack.c.l.b16 %v80
    %v298 = vunpack.c.l.b16 %v81
    %v299 = vunpack.c.l.b16 %v82
    %v300 = vunpack.c.l.b16 %v83
    %v301 = vunpack.c.l.b16 %v84
    %v302 = vunpack.c.l.b16 %v85
    %v303 = vunpack.c.l.b16 %v86
    %v304 = vunpack.c.l.b16 %v87
    %v305 = vunpack.c.l.b16 %v88
    %v306 = vunpack.c.l.b16 %v89
    %v307 = vunpack.c.l.b16 %v90
    %v308 = vunpack.c.l.b16 %v91
    %v309 = vunpack.c.l.b16 %v92
    %v310 = vunpack.c.l.b16 %v93
    %v311 = vunpack.c.l.b16 %v94
    %v312 = vunpack.c.l.b16 %v95
    %v313 = vunpack.c.l.b16 %v96
    %v314 = vunpack.c.l.b16 %v97
    %v315 = vunpack.c.l.b16 %v98
    %v316 = vunpack.c.l.b16 %v99
    %v317 = vunpack.c.l.b16 %v100
    %v318 = vunpack.c.l.b16 %v101
    %v319 = vunpack.c.l.b16 %v102
    %v320 = vunpack.c.l.b16 %v103
    %v321 = vunpack.c.l.b16 %v104
    %v322 = vunpack.c.l.b16 %v105
    %v323 = vunpack.c.l.b16 %v106
    %v324 = vunpack.c.l.b16 %v107
    %v325 = vunpack.c.l.b16 %v108
    %v326 = vunpack.c.l.b16 %v109
    %v327 = vunpack.c.l.b16 %v110
    %v328 = vunpack.c.l.b16 %v111
    %v329 = vunpack.c.l.b16 %v112
    %v330 = vunpack.c.l.b16 %v113
    %v331 = vunpack.c.l.b16 %v114
    %v332 = vunpack.c.l.b16 %v115
    %v333 = vunpack.c.l.b16 %v116
    %v334 = vunpack.c.l.b16 %v117
    %v335 = vunpack.c.l.b16 %v118
    %v336 = vunpack.c.l.b16 %v119
    %v337 = vunpack.c.l.b16 %v120
    %v338 = vunpack.c.l.b16 %v121
    %v339 = vunpack.c.l.b16 %v122
    %v340 = vunpack.c.l.b16 %v123
    %v341 = vunpack.c.l.b16 %v124
    %v342 = vunpack.c.l.b16 %v125
    %v343 = vunpack.c.l.b16 %v126
    %v344 = vunpack.c.l.b16 %v127
    %v345 = vunpack.c.l.b16 %v128
    %v346 = vunpack.c.l.b16 %v129
    %v347 = vunpack.c.l.b16 %v130
    %v348 = vunpack.c.l.b16 %v131
    %v349 = vunpack.c.l.b16 %v132
    %v350 = vunpack.c.l.b16 %v133
    %v351 = vunpack.c.l.b16 %v134
    %v352 = vunpack.c.l.b16 %v135
    %v353 = vunpack.c.l.b16 %v136
    %v354 = vunpack.c.l.b16 %v137
    %v355 = vunpack.c.l.b16 %v138
    %v356 = vunpack.c.l.b16 %v139
    %v357 = vunpack.c.l.b16 %v140
    %v358 = vunpack.c.l.b16 %v141
    %v359 = vunpack.c.l.b16 %v142
    %v360 = vunpack.c.l.b16 %v143
    %v361 = vpack.c.b16 %v266, %v265
    %v362 = vpack.c.b16 %v268, %v267
    %v363 = vpack.c.b16 %v270, %v269
    %v364 = vpack.c.b16 %v272, %v271
    %v365 = vpack.c.b16 %v274, %v273
    %v366 = vpack.c.b16 %v276, %v275
    %v367 = vpack.c.b16 %v278, %v277
    %v368 = vpack.c.b16 %v280, %v279
    %v369 = vpack.c.b16 %v282, %v281
    %v370 = vpack.c.b16 %v284, %v283
    %v371 = vpack.c.b16 %v286, %v285
    %v372 = vpack.c.b16 %v288, %v287
    %v373 = vpack.c.b16 %v290, %v289
    %v374 = vpack.c.b16 %v292, %v291
    %v375 = vpack.c.b16 %v294, %v293
    %v376 = vpack.c.b16 %v296, %v295
    %v377 = vpack.c.b16 %v298, %v297
    %v378 = vpack.c.b16 %v300, %v299
    %v379 = vpack.c.b16 %v302, %v301
    %v380 = vpack.c.b16 %v304, %v303
    %v381 = vpack.c.b16 %v306, %v305
    %v382 = vpack.c.b16 %v308, %v307
    %v383 = vpack.c.b16 %v310, %v309
    %v384 = vpack.c.b16 %v312, %v311
    %v385 = vpack.c.b16 %v314, %v313
    %v386 = vpack.c.b16 %v316, %v315
    %v387 = vpack.c.b16 %v318, %v317
    %v388 = vpack.c.b16 %v320, %v319
    %v389 = vpack.c.b16 %v322, %v321
    %v390 = vpack.c.b16 %v324, %v323
    %v391 = vpack.c.b16 %v326, %v325
    %v392 = vpack.c.b16 %v328, %v327
    %v393 = vpack.c.b16 %v330, %v329
    %v394 = vpack.c.b16 %v332, %v331
    %v395 = vpack.c.b16 %v334, %v333
    %v396 = vpack.c.b16 %v336, %v335
    %v397 = vpack.c.b16 %v338, %v337
    %v398 = vpack.c.b16 %v340, %v339
    %v399 = vpack.c.b16 %v342, %v341
    %v400 = vpack.c.b16 %v344, %v343
    %v401 = vpack.c.b16 %v346, %v345
    %v402 = vpack.c.b16 %v348, %v347
    %v403 = vpack.c.b16 %v350, %v349
    %v404 = vpack.c.b16 %v352, %v351
    %v405 = vpack.c.b16 %v354, %v353
    %v406 = vpack.c.b16 %v356, %v355
    %v407 = vpack.c.b16 %v358, %v357
    %v408 = vpack.c.b16 %v360, %v359
    %457 = vmatpush.bf16.msra.mxu0 %v368
    %458 = vmatpush.bf16.msra.mxu0 %v367
    %459 = vmatpush.bf16.msra.mxu0 %v366
    %460 = vmatpush.bf16.msra.mxu0 %v365
    %461 = vmatpush.bf16.msra.mxu0 %v364
    %462 = vmatpush.bf16.msra.mxu0 %v363
    %463 = vmatpush.bf16.msra.mxu0 %v362
    %464 = vmatpush.bf16.msra.mxu0 %v361
    %465 = vmatmul.bf16.gmra.mxu0 %v157
    %v466 = vpop.f32.mrf.mxu0
    %v467 = vadd.f32 %v146, %v466
    %v468 = vpop.f32.mrf.mxu0
    %469 = vdwg.mxu0
    %470 = vmatpush.bf16.msra.mxu0 %v376
    %471 = vmatpush.bf16.msra.mxu0 %v375
    %472 = vmatpush.bf16.msra.mxu0 %v374
    %473 = vmatpush.bf16.msra.mxu0 %v373
    %474 = vmatpush.bf16.msra.mxu0 %v372
    %475 = vmatpush.bf16.msra.mxu0 %v371
    %476 = vmatpush.bf16.msra.mxu0 %v370
    %477 = vmatpush.bf16.msra.mxu0 %v369
    %478 = vmatmul.bf16.gmra.mxu0 %v158
    %v479 = vpop.f32.mrf.mxu0
    %v480 = vadd.f32 %v467, %v479
    %v481 = vpop.f32.mrf.mxu0
    %482 = vdwg.mxu0
    %483 = vmatpush.bf16.msra.mxu0 %v384
    %484 = vmatpush.bf16.msra.mxu0 %v383
    %485 = vmatpush.bf16.msra.mxu0 %v382
    %486 = vmatpush.bf16.msra.mxu0 %v381
    %487 = vmatpush.bf16.msra.mxu0 %v380
    %488 = vmatpush.bf16.msra.mxu0 %v379
    %489 = vmatpush.bf16.msra.mxu0 %v378
    %490 = vmatpush.bf16.msra.mxu0 %v377
    %491 = vmatmul.bf16.gmra.mxu0 %v159
    %v492 = vpop.f32.mrf.mxu0
    %v493 = vadd.f32 %v480, %v492
    %v494 = vpop.f32.mrf.mxu0
    %495 = vdwg.mxu0
    %496 = vmatpush.bf16.msra.mxu0 %v392
    %497 = vmatpush.bf16.msra.mxu0 %v391
    %498 = vmatpush.bf16.msra.mxu0 %v390
    %499 = vmatpush.bf16.msra.mxu0 %v389
    %500 = vmatpush.bf16.msra.mxu0 %v388
    %501 = vmatpush.bf16.msra.mxu0 %v387
    %502 = vmatpush.bf16.msra.mxu0 %v386
    %503 = vmatpush.bf16.msra.mxu0 %v385
    %504 = vmatmul.bf16.gmra.mxu0 %v160
    %v505 = vpop.f32.mrf.mxu0
    %v506 = vadd.f32 %v493, %v505
    %v507 = vpop.f32.mrf.mxu0
    %508 = vdwg.mxu0
    %509 = vmatpush.bf16.msra.mxu0 %v400
    %510 = vmatpush.bf16.msra.mxu0 %v399
    %511 = vmatpush.bf16.msra.mxu0 %v398
    %512 = vmatpush.bf16.msra.mxu0 %v397
    %513 = vmatpush.bf16.msra.mxu0 %v396
    %514 = vmatpush.bf16.msra.mxu0 %v395
    %515 = vmatpush.bf16.msra.mxu0 %v394
    %516 = vmatpush.bf16.msra.mxu0 %v393
    %517 = vmatmul.bf16.gmra.mxu0 %v161
    %v518 = vpop.f32.mrf.mxu0
    %v519 = vadd.f32 %v506, %v518
    %v520 = vpop.f32.mrf.mxu0
    %521 = vdwg.mxu0
    %522 = vmatpush.bf16.msra.mxu0 %v408
    %523 = vmatpush.bf16.msra.mxu0 %v407
    %524 = vmatpush.bf16.msra.mxu0 %v406
    %525 = vmatpush.bf16.msra.mxu0 %v405
    %526 = vmatpush.bf16.msra.mxu0 %v404
    %527 = vmatpush.bf16.msra.mxu0 %v403
    %528 = vmatpush.bf16.msra.mxu0 %v402
    %529 = vmatpush.bf16.msra.mxu0 %v401
    %530 = vmatmul.bf16.gmra.mxu0 %v162
    %v531 = vpop.f32.mrf.mxu0
    %v532 = vadd.f32 %v519, %v531
    %v533 = vpop.f32.mrf.mxu0
    %534 = vdwg.mxu0
    %v535 = vmax.f32 %v532, 0.0
    %536 = vst [vmem:[#allocation7] sm:$0xff] %v535
    // Predicated region
    $region22: #{tpu_custom_call.1} parent=1 // pred_check
      _
    $region23: #{tpu_custom_call.1} parent=1 // pred_check_branch
      %538 = sbr.rel (0) target = $region25
    $region24: #{tpu_custom_call.1} parent=1 // pred_region
      %540 = vsyncadd [#allocation4], 0
      %s542 = sshll.u32 [#allocation7], 4
      %s543 = int_to_ptr.vmem [resolvable:$true] %s542
      %s544 = sshll.u32 %s3, 4
      %s545 = int_to_ptr.hbm [resolvable:$true] %s544
      %547 = dma.vmem_to_hbm [thread:$0]  %s543, 128, %s545, [#allocation4]
    $region25: #{tpu_custom_call.1} parent=1 // pred_fallthru
      _
    // Predicated region
    $region26: #{tpu_custom_call.1} parent=1 // pred_check
      _
    $region27: #{tpu_custom_call.1} parent=1 // pred_check_branch
      %549 = sbr.rel (0) target = $region29
    $region28: #{tpu_custom_call.1} parent=1 // pred_region
      %551 = dma.done [#allocation4], 128
    $region29: #{tpu_custom_call.1} parent=1 // pred_fallthru
      _
    %552 = vsyncpa [#allocation3], 1
    %553 = vsyncpa [#allocation6], 1
    %554 = vsyncpa [#allocation4], 1

</llo_original>
